<compile_context>
chip_gen: v5e
topology: v5e:2x2
jax: 0.10.0
libtpu: 0.0.40
codegen_flags: <defaults>
</compile_context>

<pallas_src>
import jax
import jax.numpy as jnp
from jax.experimental import pallas as pl
from jax.experimental.pallas import tpu as pltpu


# ---------------------------------------------------------------------------
# Kernel: whole 3-layer MoE MLP in one invocation, 3 MXU matmuls total.
# Matmul inputs in the packed-weight dtype (bf16); accumulate / bias / ReLU in f32.
# ---------------------------------------------------------------------------
def _moe_mlp_kernel(x_ref, w1_ref, b1_ref, w2_ref, b2_ref, w3_ref, b3_ref, o_ref):
    # x_ref : (Bt, I)              f32
    # w1_ref: (I, K*H1p)           b1_ref: (1, K*H1p)   f32 bias
    # w2_ref: (K*H1p, K*H2p)       b2_ref: (1, K*H2p)   (block-diagonal over encoders)
    # w3_ref: (K*H2p, K*Op)        b3_ref: (1, K*Op)    (block-diagonal over encoders)
    # o_ref : (Bt, K*Op)           lane-dense output slab, f32
    mm_dtype = w1_ref.dtype  # bf16 (or f32 if caller disabled the cast)
    x = x_ref[...].astype(mm_dtype)
    h = jnp.dot(x, w1_ref[...], preferred_element_type=jnp.float32) + b1_ref[...]
    h = jnp.maximum(h, 0.0)
    h = jnp.dot(h.astype(mm_dtype), w2_ref[...],
                preferred_element_type=jnp.float32) + b2_ref[...]
    h = jnp.maximum(h, 0.0)
    out = jnp.dot(h.astype(mm_dtype), w3_ref[...],
                  preferred_element_type=jnp.float32) + b3_ref[...]
    o_ref[...] = out.astype(o_ref.dtype)


# ---------------------------------------------------------------------------
# One-time weight packing (layout plumbing; runs at encoder construction only).
# ---------------------------------------------------------------------------
def _round_up(n, m):
    return -(-n // m) * m


def _padded_width(dim, k):
    """Smallest per-encoder pad (<=64) that makes the packed width k*dim_pad a full
    128-lane multiple; otherwise fall back to a sublane multiple of 8 (odd K)."""
    for m in (8, 16, 32, 64):
        if (k * m) % 128 == 0:
            return _round_up(dim, m)
    return _round_up(dim, 8)


def _pack_layer1(w, b, h_pad):
    """(K, I, H) weight / (K, 1, H) bias -> shared-input packed (I, K*h_pad), (1, K*h_pad)."""
    k, i, h = w.shape
    wp = jnp.zeros((k, i, h_pad), w.dtype).at[:, :, :h].set(w)
    wp = jnp.transpose(wp, (1, 0, 2)).reshape(i, k * h_pad)
    bp = jnp.zeros((k, h_pad), b.dtype).at[:, :h].set(b[:, 0, :]).reshape(1, k * h_pad)
    return wp, bp


def _pack_blockdiag(w, b, in_pad, out_pad):
    """(K, Hin, Hout) weight -> block-diagonal (K*in_pad, K*out_pad); bias -> (1, K*out_pad)."""
    k, hi, ho = w.shape
    wp = jnp.zeros((k, in_pad, out_pad), w.dtype).at[:, :hi, :ho].set(w)
    eye = jnp.eye(k, dtype=w.dtype)
    bd = jnp.einsum("kl,kio->kilo", eye, wp).reshape(k * in_pad, k * out_pad)
    bp = jnp.zeros((k, out_pad), b.dtype).at[:, :ho].set(b[:, 0, :]).reshape(1, k * out_pad)
    return bd, bp


def _pack_params(params, compute_dtype):
    (w1, b1), (w2, b2), (w3, b3) = params
    k, i, h1 = w1.shape
    h2 = w2.shape[2]
    o = w3.shape[2]
    h1p = _padded_width(h1, k)
    h2p = _padded_width(h2, k)
    op = _padded_width(o, k)

    w1p, b1p = _pack_layer1(w1, b1, h1p)
    w2p, b2p = _pack_blockdiag(w2, b2, h1p, h2p)
    w3p, b3p = _pack_blockdiag(w3, b3, h2p, op)

    packed = (w1p.astype(compute_dtype), b1p.astype(jnp.float32),
              w2p.astype(compute_dtype), b2p.astype(jnp.float32),
              w3p.astype(compute_dtype), b3p.astype(jnp.float32))
    dims = dict(K=k, I=i, O=o, Op=op)
    return packed, dims


# ---------------------------------------------------------------------------
# Factory: pack once, return a jitted forward(x) -> (batch, num_encoders, out_dim).
# ---------------------------------------------------------------------------
def make_feed_forward_encoder(params, compute_dtype=jnp.bfloat16, batch_tile=512):
    """params = [(W1, b1), (W2, b2), (W3, b3)] with W_l: (K, in_l, out_l), b_l: (K, 1, out_l),
    matching the PyTorch module's parameters."""
    packed, dims = _pack_params(params, compute_dtype)
    K, I, O, Op = dims["K"], dims["I"], dims["O"], dims["Op"]
    slab_width = K * Op
    vmem = pltpu.MemorySpace.VMEM

    def _forward(x, packed_arrays):
        w1p, b1p, w2p, b2p, w3p, b3p = packed_arrays
        B = x.shape[0]

        if B <= batch_tile:
            # Tiny problem: single invocation, everything whole in VMEM (~0.25 MiB
            # packed bf16 weights), zero pipeline/per-step overhead.
            slab = pl.pallas_call(
                _moe_mlp_kernel,
                out_shape=jax.ShapeDtypeStruct((B, slab_width), x.dtype),
                in_specs=[pl.BlockSpec(memory_space=vmem)] * 7,
                out_specs=pl.BlockSpec(memory_space=vmem),
            )(x, w1p, b1p, w2p, b2p, w3p, b3p)
        else:
            # Scaling path: tile over batch, keep packed weights resident per step,
            # mark the batch axis "parallel" so v7x shards tiles across its 2 TCs
            # and BlockSpec double-buffers the x/out DMAs under compute.
            bt = batch_tile
            Bp = _round_up(B, bt)
            x_in = x if Bp == B else jnp.pad(x, ((0, Bp - B), (0, 0)))

            def _whole(arr):
                return pl.BlockSpec(arr.shape, lambda i: (0,) * arr.ndim)

            slab = pl.pallas_call(
                _moe_mlp_kernel,
                out_shape=jax.ShapeDtypeStruct((Bp, slab_width), x.dtype),
                grid=(Bp // bt,),
                in_specs=[pl.BlockSpec((bt, I), lambda i: (i, 0)),
                          _whole(w1p), _whole(b1p),
                          _whole(w2p), _whole(b2p),
                          _whole(w3p), _whole(b3p)],
                out_specs=pl.BlockSpec((bt, slab_width), lambda i: (i, 0)),
                compiler_params=pltpu.CompilerParams(
                    dimension_semantics=("parallel",)),
            )(x_in, w1p, b1p, w2p, b2p, w3p, b3p)
            slab = slab[:B]

        out = slab.reshape(-1, K, Op)  # free reshape — already (batch, encoder, out) order
        if Op != O:
            out = out[:, :, :O]
        return out

    forward_jit = jax.jit(_forward)

    def forward(x):
        return forward_jit(x, packed)

    return forward


# ---------------------------------------------------------------------------
# Params / reference / self-test
# ---------------------------------------------------------------------------
def init_params(key, num_encoders, input_dim, output_dim, hidden_dims=(50, 50)):
    """Deterministic synthetic params matching nn.Parameter(torch.randn(...)) shapes."""
    dims = [input_dim] + list(hidden_dims) + [output_dim]
    params = []
    for in_d, out_d in zip(dims[:-1], dims[1:]):
        key, kw, kb = jax.random.split(key, 3)
        W = jax.random.normal(kw, (num_encoders, in_d, out_d), dtype=jnp.float32)
        b = jax.random.normal(kb, (num_encoders, 1, out_d), dtype=jnp.float32)
        params.append((W, b))
    return params


def _reference(x, params, compute_dtype=jnp.bfloat16):
    """Module-equivalent forward. Mirrors the kernel's bf16-input / f32-accumulate
    matmuls (quantize matmul operands, keep bias+ReLU in f32) so the self-test
    tolerance stays tight while semantics match the PyTorch module."""
    def q(a):
        return a.astype(compute_dtype).astype(jnp.float32)

    hp = jax.lax.Precision.HIGHEST
    (w1, b1), (w2, b2), (w3, b3) = params
    h = jnp.einsum("kio,bi->kbo", q(w1), q(x), precision=hp) + b1
    h = jnp.maximum(h, 0.0)
    h = jnp.einsum("kio,kbi->kbo", q(w2), q(h), precision=hp) + b2
    h = jnp.maximum(h, 0.0)
    out = jnp.einsum("kio,kbi->kbo", q(w3), q(h), precision=hp) + b3
    return jnp.transpose(out, (1, 0, 2))


if __name__ == "__main__":
    num_encoders = 4
    input_dim = 16
    output_dim = 32
    batch = 8

    key = jax.random.PRNGKey(0)
    key_p, key_x = jax.random.split(key)
    params = init_params(key_p, num_encoders, input_dim, output_dim)
    x = jax.random.normal(key_x, (batch, input_dim), dtype=jnp.float32)

    # Pack once (hoisted out of the per-call path), get a jitted forward.
    forward = make_feed_forward_encoder(params)

    out = jax.block_until_ready(forward(x))

    ref = _reference(x, params)
    assert out.shape == (batch, num_encoders, output_dim)
    assert jnp.allclose(out, ref, atol=1e-2, rtol=1e-3), float(jnp.max(jnp.abs(out - ref)))

    print("KERNEL_OK")
</pallas_src>

<mosaic_0001>
module attributes {stable_mosaic.version = 11 : i64} {
  func.func @_moe_mlp_kernel(%arg0: memref<8x16xf32, #tpu.memory_space<vmem>>, %arg1: memref<16x256xbf16, #tpu.memory_space<vmem>>, %arg2: memref<1x256xf32, #tpu.memory_space<vmem>>, %arg3: memref<256x256xbf16, #tpu.memory_space<vmem>>, %arg4: memref<1x256xf32, #tpu.memory_space<vmem>>, %arg5: memref<256x128xbf16, #tpu.memory_space<vmem>>, %arg6: memref<1x128xf32, #tpu.memory_space<vmem>>, %arg7: memref<8x128xf32, #tpu.memory_space<vmem>>) attributes {dimension_semantics = [], scalar_prefetch = 0 : i64, scratch_operands = 0 : i64, tpu.core_type = #tpu.core_type<tc>} {
    %c0 = arith.constant 0 : index
    %c0_0 = arith.constant 0 : index
    %0 = vector.load %arg0[%c0, %c0_0] : memref<8x16xf32, #tpu.memory_space<vmem>>, vector<8x16xf32>
    %1 = arith.truncf %0 : vector<8x16xf32> to vector<8x16xbf16>
    %c0_1 = arith.constant 0 : index
    %c0_2 = arith.constant 0 : index
    %2 = vector.load %arg1[%c0_1, %c0_2] : memref<16x256xbf16, #tpu.memory_space<vmem>>, vector<16x256xbf16>
    %cst = arith.constant dense<0.000000e+00> : vector<8x256xf32>
    %3 = tpu.matmul %1, %2, %cst {dimension_numbers = #tpu.dot_dimension_numbers<[1], [0], [0], [1], [0, 0, 1, 1], [], []>} : vector<8x16xbf16>, vector<16x256xbf16>, vector<8x256xf32> -> vector<8x256xf32>
    %c0_3 = arith.constant 0 : index
    %c0_4 = arith.constant 0 : index
    %4 = vector.load %arg2[%c0_3, %c0_4] : memref<1x256xf32, #tpu.memory_space<vmem>>, vector<1x256xf32>
    %5 = vector.broadcast %4 : vector<1x256xf32> to vector<8x256xf32>
    %6 = arith.addf %3, %5 : vector<8x256xf32>
    %cst_5 = arith.constant 0.000000e+00 : f32
    %7 = vector.broadcast %cst_5 : f32 to vector<8x256xf32>
    %8 = arith.maximumf %6, %7 : vector<8x256xf32>
    %9 = arith.truncf %8 : vector<8x256xf32> to vector<8x256xbf16>
    %c0_6 = arith.constant 0 : index
    %c0_7 = arith.constant 0 : index
    %10 = vector.load %arg3[%c0_6, %c0_7] : memref<256x256xbf16, #tpu.memory_space<vmem>>, vector<256x256xbf16>
    %cst_8 = arith.constant dense<0.000000e+00> : vector<8x256xf32>
    %11 = tpu.matmul %9, %10, %cst_8 {dimension_numbers = #tpu.dot_dimension_numbers<[1], [0], [0], [1], [0, 0, 1, 1], [], []>} : vector<8x256xbf16>, vector<256x256xbf16>, vector<8x256xf32> -> vector<8x256xf32>
    %c0_9 = arith.constant 0 : index
    %c0_10 = arith.constant 0 : index
    %12 = vector.load %arg4[%c0_9, %c0_10] : memref<1x256xf32, #tpu.memory_space<vmem>>, vector<1x256xf32>
    %13 = vector.broadcast %12 : vector<1x256xf32> to vector<8x256xf32>
    %14 = arith.addf %11, %13 : vector<8x256xf32>
    %cst_11 = arith.constant 0.000000e+00 : f32
    %15 = vector.broadcast %cst_11 : f32 to vector<8x256xf32>
    %16 = arith.maximumf %14, %15 : vector<8x256xf32>
    %17 = arith.truncf %16 : vector<8x256xf32> to vector<8x256xbf16>
    %c0_12 = arith.constant 0 : index
    %c0_13 = arith.constant 0 : index
    %18 = vector.load %arg5[%c0_12, %c0_13] : memref<256x128xbf16, #tpu.memory_space<vmem>>, vector<256x128xbf16>
    %cst_14 = arith.constant dense<0.000000e+00> : vector<8x128xf32>
    %19 = tpu.matmul %17, %18, %cst_14 {dimension_numbers = #tpu.dot_dimension_numbers<[1], [0], [0], [1], [0, 0, 1, 1], [], []>} : vector<8x256xbf16>, vector<256x128xbf16>, vector<8x128xf32> -> vector<8x128xf32>
    %c0_15 = arith.constant 0 : index
    %c0_16 = arith.constant 0 : index
    %20 = vector.load %arg6[%c0_15, %c0_16] : memref<1x128xf32, #tpu.memory_space<vmem>>, vector<1x128xf32>
    %21 = vector.broadcast %20 : vector<1x128xf32> to vector<8x128xf32>
    %22 = arith.addf %19, %21 : vector<8x128xf32>
    %c0_17 = arith.constant 0 : index
    %c0_18 = arith.constant 0 : index
    %23 = vector.load %arg7[%c0_17, %c0_18] : memref<8x128xf32, #tpu.memory_space<vmem>>, vector<8x128xf32>
    tpu.vector_store %arg7[%c0_17, %c0_18], %22 {strides = array<i32>} : memref<8x128xf32, #tpu.memory_space<vmem>>, vector<8x128xf32>,
    return
  }
}

</mosaic_0001>

<llo_original>
// kernel: _forward.1
$region0: #{_forward.1}
  #allocation0 [shape = 'u32[]', space=smem, size = 0x4, offset = 0x4, fixed_abs, tag = 'smem constant byte address 0x4 - core index']
  #allocation1 [shape = 'u32[72,128]{1,0:T(1,128)}', space=vmem, size = 0x9000, scoped, tag = 'internal scratch']
  %s0 = inlined_call_operand.hbm [shape: f32[8,16], index: 0, kind: input, shape index: {}]
  %s1 = inlined_call_operand.hbm [shape: bf16[16,256], index: 1, kind: input, shape index: {}]
  %s2 = inlined_call_operand.hbm [shape: f32[1,256], index: 2, kind: input, shape index: {}]
  %s3 = inlined_call_operand.hbm [shape: bf16[256,256], index: 3, kind: input, shape index: {}]
  %s4 = inlined_call_operand.vmem [shape: f32[1,256], index: 4, kind: input, shape index: {}]
  %s5 = inlined_call_operand.hbm [shape: bf16[256,128], index: 5, kind: input, shape index: {}]
  %s6 = inlined_call_operand.vmem [shape: f32[1,128], index: 6, kind: input, shape index: {}]
  %s7 = inlined_call_operand.vmem [shape: f32[8,128], index: 7, kind: output, shape index: {}]
  %s8 = sld [smem:[#allocation0]]
  $region58: #{_forward.1} parent=0
    _
  %s10 = ssub.s32 1, %s8
  %s11 = scalar_select 0, %s10, %s8
  $region1: #{_forward.1} parent=0
    #allocation2 [shape = 'u8[4096]{0}', space=vmem, size = 0x1000, scoped, tag = 'input window, operand 0, single buffered']
    #allocation3 [shape = 's32[1]{0}', space=sflag, size = 0x4, scoped, tag = 'scoped memory for _forward.1']
    #allocation4 [shape = 'u8[8192]{0}', space=vmem, size = 0x2000, scoped, tag = 'input window, operand 1, single buffered']
    #allocation5 [shape = 's32[1]{0}', space=sflag, size = 0x4, scoped, tag = 'scoped memory for _forward.1']
    #allocation6 [shape = 'u8[1024]{0}', space=vmem, size = 0x400, scoped, tag = 'input window, operand 2, single buffered']
    #allocation7 [shape = 'u8[131072]{0}', space=vmem, size = 0x20000, scoped, tag = 'input window, operand 3, single buffered']
    #allocation8 [shape = 's32[1]{0}', space=sflag, size = 0x4, scoped, tag = 'scoped memory for _forward.1']
    #allocation9 [shape = 'u8[65536]{0}', space=vmem, size = 0x10000, scoped, tag = 'input window, operand 5, single buffered']
    %12 = vsyncpa [#allocation3], 0
    %13 = vsyncpa [#allocation5], 0
    %14 = vsyncpa [#allocation8], 0
    // Predicated region
    $region2: #{_forward.1} parent=1 // pred_check
      _
    $region3: #{_forward.1} parent=1 // pred_check_branch
      %16 = sbr.rel (0) target = $region5
    $region4: #{_forward.1} parent=1 // pred_region
      %18 = vsyncadd [#allocation3], 0
      %s20 = sshll.u32 %s0, 4
      %s21 = int_to_ptr.hbm [resolvable:$true] %s20
      %s22 = sshll.u32 [#allocation2], 4
      %s23 = int_to_ptr.vmem [resolvable:$true] %s22
      %25 = dma.hbm_to_vmem [thread:$0]  %s21, 128, %s23, [#allocation3]
    $region5: #{_forward.1} parent=1 // pred_fallthru
      _
    // Predicated region
    $region6: #{_forward.1} parent=1 // pred_check
      _
    $region7: #{_forward.1} parent=1 // pred_check_branch
      %27 = sbr.rel (0) target = $region9
    $region8: #{_forward.1} parent=1 // pred_region
      %29 = vsyncadd [#allocation5], 0
      %s30 = sshll.u32 %s1, 4
      %s31 = int_to_ptr.hbm [resolvable:$true] %s30
      %s32 = sshll.u32 [#allocation4], 4
      %s33 = int_to_ptr.vmem [resolvable:$true] %s32
      %38 = dma.hbm_to_vmem [thread:$0]  %s31, 256, %s33, [#allocation5], 128, 128, 8
    $region9: #{_forward.1} parent=1 // pred_fallthru
      _
    // Predicated region
    $region10: #{_forward.1} parent=1 // pred_check
      _
    $region11: #{_forward.1} parent=1 // pred_check_branch
      %40 = sbr.rel (0) target = $region13
    $region12: #{_forward.1} parent=1 // pred_region
      %42 = vsyncadd [#allocation5], 0
      %s44 = sshll.u32 %s2, 4
      %s45 = int_to_ptr.hbm [resolvable:$true] %s44
      %s46 = sshll.u32 [#allocation6], 4
      %s47 = int_to_ptr.vmem [resolvable:$true] %s46
      %49 = dma.hbm_to_vmem [thread:$0]  %s45, 32, %s47, [#allocation5]
    $region13: #{_forward.1} parent=1 // pred_fallthru
      _
    // Predicated region
    $region14: #{_forward.1} parent=1 // pred_check
      _
    $region15: #{_forward.1} parent=1 // pred_check_branch
      %51 = sbr.rel (0) target = $region17
    $region16: #{_forward.1} parent=1 // pred_region
      %53 = vsyncadd [#allocation8], 0
      %s54 = sshll.u32 %s3, 4
      %s55 = int_to_ptr.hbm [resolvable:$true] %s54
      %s56 = sshll.u32 [#allocation7], 4
      %s57 = int_to_ptr.vmem [resolvable:$true] %s56
      %62 = dma.hbm_to_vmem [thread:$0]  %s55, 4096, %s57, [#allocation8], 128, 128, 8
    $region17: #{_forward.1} parent=1 // pred_fallthru
      _
    // Predicated region
    $region18: #{_forward.1} parent=1 // pred_check
      _
    $region19: #{_forward.1} parent=1 // pred_check_branch
      %64 = sbr.rel (0) target = $region21
    $region20: #{_forward.1} parent=1 // pred_region
      _
    $region21: #{_forward.1} parent=1 // pred_fallthru
      _
    // Predicated region
    $region22: #{_forward.1} parent=1 // pred_check
      _
    $region23: #{_forward.1} parent=1 // pred_check_branch
      %66 = sbr.rel (0) target = $region25
    $region24: #{_forward.1} parent=1 // pred_region
      %68 = vsyncadd [#allocation8], 0
      %s69 = sshll.u32 %s5, 4
      %s70 = int_to_ptr.hbm [resolvable:$true] %s69
      %s71 = sshll.u32 [#allocation9], 4
      %s72 = int_to_ptr.vmem [resolvable:$true] %s71
      %77 = dma.hbm_to_vmem [thread:$0]  %s70, 2048, %s72, [#allocation8], 64, 64, 4
    $region25: #{_forward.1} parent=1 // pred_fallthru
      _
    // Predicated region
    $region26: #{_forward.1} parent=1 // pred_check
      _
    $region27: #{_forward.1} parent=1 // pred_check_branch
      %79 = sbr.rel (0) target = $region29
    $region28: #{_forward.1} parent=1 // pred_region
      _
    $region29: #{_forward.1} parent=1 // pred_fallthru
      _
    // Predicated region
    $region30: #{_forward.1} parent=1 // pred_check
      _
    $region31: #{_forward.1} parent=1 // pred_check_branch
      %81 = sbr.rel (0) target = $region33
    $region32: #{_forward.1} parent=1 // pred_region
      %83 = dma.done [#allocation3], 128
    $region33: #{_forward.1} parent=1 // pred_fallthru
      _
    // Predicated region
    $region34: #{_forward.1} parent=1 // pred_check
      _
    $region35: #{_forward.1} parent=1 // pred_check_branch
      %85 = sbr.rel (0) target = $region37
    $region36: #{_forward.1} parent=1 // pred_region
      %87 = dma.done [#allocation5], 256
    $region37: #{_forward.1} parent=1 // pred_fallthru
      _
    // Predicated region
    $region38: #{_forward.1} parent=1 // pred_check
      _
    $region39: #{_forward.1} parent=1 // pred_check_branch
      %89 = sbr.rel (0) target = $region41
    $region40: #{_forward.1} parent=1 // pred_region
      %91 = dma.done [#allocation5], 32
    $region41: #{_forward.1} parent=1 // pred_fallthru
      _
    // Predicated region
    $region42: #{_forward.1} parent=1 // pred_check
      _
    $region43: #{_forward.1} parent=1 // pred_check_branch
      %93 = sbr.rel (0) target = $region45
    $region44: #{_forward.1} parent=1 // pred_region
      %95 = dma.done [#allocation8], 4096
    $region45: #{_forward.1} parent=1 // pred_fallthru
      _
    // Predicated region
    $region46: #{_forward.1} parent=1 // pred_check
      _
    $region47: #{_forward.1} parent=1 // pred_check_branch
      %97 = sbr.rel (0) target = $region49
    $region48: #{_forward.1} parent=1 // pred_region
      %99 = dma.done [#allocation8], 2048
    $region49: #{_forward.1} parent=1 // pred_fallthru
      _
    %v101 = vld [vmem:[#allocation2] sm:$0xff]
    %v102 = vpack.c.bf16 %v101, %v101
    %v103 = vld [vmem:[#allocation4] sm:$0xff]
    %v104 = vld [vmem:[#allocation4 + $0x8] sm:$0xff]
    %v105 = vld [vmem:[#allocation6] sm:$0x3]
    %v107 = vperm.slane %v105, 0
    %v108 = vperm.slane %v105, 1
    %v113 = vunpack.c.l.b16 %v103
    %v114 = vunpack.c.h.b16 %v103
    %v115 = vunpack.c.l.b16 %v104
    %v116 = vunpack.c.h.b16 %v104
    %v117 = vpack.c.b16 %v115, %v113
    %v118 = vpack.c.b16 %v116, %v114
    %vm121 = vcmask 130048
    %v123 = vsel %vm121, %v102, 0
    %125 = vmatpush.bf16.msra.mxu0 0
    %126 = vmatpush.bf16.msra.mxu0 0
    %127 = vmatpush.bf16.msra.mxu0 0
    %128 = vmatpush.bf16.msra.mxu0 0
    %129 = vmatpush.bf16.msra.mxu0 0
    %130 = vmatpush.bf16.msra.mxu0 0
    %131 = vmatpush.bf16.msra.mxu0 0
    %132 = vmatpush.bf16.msra.mxu0 %v117
    %133 = vmatmul.bf16.gmra.mxu0 %v123
    %v134 = vpop.f32.mrf.mxu0
    %v135 = vadd.f32 %v107, %v134
    %v136 = vpop.f32.mrf.mxu0
    %137 = vdwg.mxu0
    %138 = vmatpush.bf16.msra.mxu0 0
    %139 = vmatpush.bf16.msra.mxu0 0
    %140 = vmatpush.bf16.msra.mxu0 0
    %141 = vmatpush.bf16.msra.mxu0 0
    %142 = vmatpush.bf16.msra.mxu0 0
    %143 = vmatpush.bf16.msra.mxu0 0
    %144 = vmatpush.bf16.msra.mxu0 0
    %145 = vmatpush.bf16.msra.mxu0 %v118
    %146 = vmatmul.bf16.gmra.mxu0 %v123
    %v147 = vpop.f32.mrf.mxu0
    %v148 = vadd.f32 %v108, %v147
    %v149 = vpop.f32.mrf.mxu0
    %150 = vdwg.mxu0
    %v151 = vmax.f32 %v135, 0.0
    %v152 = vmax.f32 %v148, 0.0
    %v153 = vpack.c.bf16 %v151, %v151
    %v154 = vpack.c.bf16 %v152, %v152
    %v155 = vld [vmem:[#allocation7] sm:$0xff]
    %v156 = vld [vmem:[#allocation7 + $0x8] sm:$0xff]
    %v157 = vld [vmem:[#allocation7 + $0x10] sm:$0xff]
    %v158 = vld [vmem:[#allocation7 + $0x18] sm:$0xff]
    %v159 = vld [vmem:[#allocation7 + $0x20] sm:$0xff]
    %v160 = vld [vmem:[#allocation7 + $0x28] sm:$0xff]
    %v161 = vld [vmem:[#allocation7 + $0x30] sm:$0xff]
    %v162 = vld [vmem:[#allocation7 + $0x38] sm:$0xff]
    %v163 = vld [vmem:[#allocation7 + $0x40] sm:$0xff]
    %v164 = vld [vmem:[#allocation7 + $0x48] sm:$0xff]
    %v165 = vld [vmem:[#allocation7 + $0x50] sm:$0xff]
    %v166 = vld [vmem:[#allocation7 + $0x58] sm:$0xff]
    %v167 = vld [vmem:[#allocation7 + $0x60] sm:$0xff]
    %v168 = vld [vmem:[#allocation7 + $0x68] sm:$0xff]
    %v169 = vld [vmem:[#allocation7 + $0x70] sm:$0xff]
    %v170 = vld [vmem:[#allocation7 + $0x78] sm:$0xff]
    %v171 = vld [vmem:[#allocation7 + $0x80] sm:$0xff]
    %v172 = vld [vmem:[#allocation7 + $0x88] sm:$0xff]
    %v173 = vld [vmem:[#allocation7 + $0x90] sm:$0xff]
    %v174 = vld [vmem:[#allocation7 + $0x98] sm:$0xff]
    %v175 = vld [vmem:[#allocation7 + $0xa0] sm:$0xff]
    %v176 = vld [vmem:[#allocation7 + $0xa8] sm:$0xff]
    %v177 = vld [vmem:[#allocation7 + $0xb0] sm:$0xff]
    %v178 = vld [vmem:[#allocation7 + $0xb8] sm:$0xff]
    %v179 = vld [vmem:[#allocation7 + $0xc0] sm:$0xff]
    %v180 = vld [vmem:[#allocation7 + $0xc8] sm:$0xff]
    %v181 = vld [vmem:[#allocation7 + $0xd0] sm:$0xff]
    %v182 = vld [vmem:[#allocation7 + $0xd8] sm:$0xff]
    %v183 = vld [vmem:[#allocation7 + $0xe0] sm:$0xff]
    %v184 = vld [vmem:[#allocation7 + $0xe8] sm:$0xff]
    %v185 = vld [vmem:[#allocation7 + $0xf0] sm:$0xff]
    %v186 = vld [vmem:[#allocation7 + $0xf8] sm:$0xff]
    %v187 = vld [vmem:[%s4] sm:$0x3]
    %v189 = vperm.slane %v187, 0
    %v190 = vperm.slane %v187, 1
    %v225 = vunpack.c.l.b16 %v155
    %v226 = vunpack.c.h.b16 %v155
    %v227 = vunpack.c.l.b16 %v156
    %v228 = vunpack.c.h.b16 %v156
    %v229 = vunpack.c.l.b16 %v157
    %v230 = vunpack.c.h.b16 %v157
    %v231 = vunpack.c.l.b16 %v158
    %v232 = vunpack.c.h.b16 %v158
    %v233 = vunpack.c.l.b16 %v159
    %v234 = vunpack.c.h.b16 %v159
    %v235 = vunpack.c.l.b16 %v160
    %v236 = vunpack.c.h.b16 %v160
    %v237 = vunpack.c.l.b16 %v161
    %v238 = vunpack.c.h.b16 %v161
    %v239 = vunpack.c.l.b16 %v162
    %v240 = vunpack.c.h.b16 %v162
    %v241 = vunpack.c.l.b16 %v163
    %v242 = vunpack.c.h.b16 %v163
    %v243 = vunpack.c.l.b16 %v164
    %v244 = vunpack.c.h.b16 %v164
    %v245 = vunpack.c.l.b16 %v165
    %v246 = vunpack.c.h.b16 %v165
    %v247 = vunpack.c.l.b16 %v166
    %v248 = vunpack.c.h.b16 %v166
    %v249 = vunpack.c.l.b16 %v167
    %v250 = vunpack.c.h.b16 %v167
    %v251 = vunpack.c.l.b16 %v168
    %v252 = vunpack.c.h.b16 %v168
    %v253 = vunpack.c.l.b16 %v169
    %v254 = vunpack.c.h.b16 %v169
    %v255 = vunpack.c.l.b16 %v170
    %v256 = vunpack.c.h.b16 %v170
    %v257 = vunpack.c.l.b16 %v171
    %v258 = vunpack.c.h.b16 %v171
    %v259 = vunpack.c.l.b16 %v172
    %v260 = vunpack.c.h.b16 %v172
    %v261 = vunpack.c.l.b16 %v173
    %v262 = vunpack.c.h.b16 %v173
    %v263 = vunpack.c.l.b16 %v174
    %v264 = vunpack.c.h.b16 %v174
    %v265 = vunpack.c.l.b16 %v175
    %v266 = vunpack.c.h.b16 %v175
    %v267 = vunpack.c.l.b16 %v176
    %v268 = vunpack.c.h.b16 %v176
    %v269 = vunpack.c.l.b16 %v177
    %v270 = vunpack.c.h.b16 %v177
    %v271 = vunpack.c.l.b16 %v178
    %v272 = vunpack.c.h.b16 %v178
    %v273 = vunpack.c.l.b16 %v179
    %v274 = vunpack.c.h.b16 %v179
    %v275 = vunpack.c.l.b16 %v180
    %v276 = vunpack.c.h.b16 %v180
    %v277 = vunpack.c.l.b16 %v181
    %v278 = vunpack.c.h.b16 %v181
    %v279 = vunpack.c.l.b16 %v182
    %v280 = vunpack.c.h.b16 %v182
    %v281 = vunpack.c.l.b16 %v183
    %v282 = vunpack.c.h.b16 %v183
    %v283 = vunpack.c.l.b16 %v184
    %v284 = vunpack.c.h.b16 %v184
    %v285 = vunpack.c.l.b16 %v185
    %v286 = vunpack.c.h.b16 %v185
    %v287 = vunpack.c.l.b16 %v186
    %v288 = vunpack.c.h.b16 %v186
    %v289 = vpack.c.b16 %v227, %v225
    %v290 = vpack.c.b16 %v228, %v226
    %v291 = vpack.c.b16 %v231, %v229
    %v292 = vpack.c.b16 %v232, %v230
    %v293 = vpack.c.b16 %v235, %v233
    %v294 = vpack.c.b16 %v236, %v234
    %v295 = vpack.c.b16 %v239, %v237
    %v296 = vpack.c.b16 %v240, %v238
    %v297 = vpack.c.b16 %v243, %v241
    %v298 = vpack.c.b16 %v244, %v242
    %v299 = vpack.c.b16 %v247, %v245
    %v300 = vpack.c.b16 %v248, %v246
    %v301 = vpack.c.b16 %v251, %v249
    %v302 = vpack.c.b16 %v252, %v250
    %v303 = vpack.c.b16 %v255, %v253
    %v304 = vpack.c.b16 %v256, %v254
    %v305 = vpack.c.b16 %v259, %v257
    %v306 = vpack.c.b16 %v260, %v258
    %v307 = vpack.c.b16 %v263, %v261
    %v308 = vpack.c.b16 %v264, %v262
    %v309 = vpack.c.b16 %v267, %v265
    %v310 = vpack.c.b16 %v268, %v266
    %v311 = vpack.c.b16 %v271, %v269
    %v312 = vpack.c.b16 %v272, %v270
    %v313 = vpack.c.b16 %v275, %v273
    %v314 = vpack.c.b16 %v276, %v274
    %v315 = vpack.c.b16 %v279, %v277
    %v316 = vpack.c.b16 %v280, %v278
    %v317 = vpack.c.b16 %v283, %v281
    %v318 = vpack.c.b16 %v284, %v282
    %v319 = vpack.c.b16 %v287, %v285
    %v320 = vpack.c.b16 %v288, %v286
    %353 = vmatpush.bf16.msra.mxu0 %v303
    %354 = vmatpush.bf16.msra.mxu0 %v301
    %355 = vmatpush.bf16.msra.mxu0 %v299
    %356 = vmatpush.bf16.msra.mxu0 %v297
    %357 = vmatpush.bf16.msra.mxu0 %v295
    %358 = vmatpush.bf16.msra.mxu0 %v293
    %359 = vmatpush.bf16.msra.mxu0 %v291
    %360 = vmatpush.bf16.msra.mxu0 %v289
    %361 = vmatmul.bf16.gmra.mxu0 %v153
    %v362 = vpop.f32.mrf.mxu0
    %v363 = vadd.f32 %v189, %v362
    %v364 = vpop.f32.mrf.mxu0
    %365 = vdwg.mxu0
    %366 = vmatpush.bf16.msra.mxu0 %v319
    %367 = vmatpush.bf16.msra.mxu0 %v317
    %368 = vmatpush.bf16.msra.mxu0 %v315
    %369 = vmatpush.bf16.msra.mxu0 %v313
    %370 = vmatpush.bf16.msra.mxu0 %v311
    %371 = vmatpush.bf16.msra.mxu0 %v309
    %372 = vmatpush.bf16.msra.mxu0 %v307
    %373 = vmatpush.bf16.msra.mxu0 %v305
    %374 = vmatmul.bf16.gmra.mxu0 %v154
    %v375 = vpop.f32.mrf.mxu0
    %v376 = vadd.f32 %v363, %v375
    %v377 = vpop.f32.mrf.mxu0
    %378 = vdwg.mxu0
    %379 = vmatpush.bf16.msra.mxu0 %v304
    %380 = vmatpush.bf16.msra.mxu0 %v302
    %381 = vmatpush.bf16.msra.mxu0 %v300
    %382 = vmatpush.bf16.msra.mxu0 %v298
    %383 = vmatpush.bf16.msra.mxu0 %v296
    %384 = vmatpush.bf16.msra.mxu0 %v294
    %385 = vmatpush.bf16.msra.mxu0 %v292
    %386 = vmatpush.bf16.msra.mxu0 %v290
    %387 = vmatmul.bf16.gmra.mxu0 %v153
    %v388 = vpop.f32.mrf.mxu0
    %v389 = vadd.f32 %v190, %v388
    %v390 = vpop.f32.mrf.mxu0
    %391 = vdwg.mxu0
    %392 = vmatpush.bf16.msra.mxu0 %v320
    %393 = vmatpush.bf16.msra.mxu0 %v318
    %394 = vmatpush.bf16.msra.mxu0 %v316
    %395 = vmatpush.bf16.msra.mxu0 %v314
    %396 = vmatpush.bf16.msra.mxu0 %v312
    %397 = vmatpush.bf16.msra.mxu0 %v310
    %398 = vmatpush.bf16.msra.mxu0 %v308
    %399 = vmatpush.bf16.msra.mxu0 %v306
    %400 = vmatmul.bf16.gmra.mxu0 %v154
    %v401 = vpop.f32.mrf.mxu0
    %v402 = vadd.f32 %v389, %v401
    %v403 = vpop.f32.mrf.mxu0
    %404 = vdwg.mxu0
    %v405 = vmax.f32 %v376, 0.0
    %v406 = vmax.f32 %v402, 0.0
    %v407 = vpack.c.bf16 %v405, %v405
    %v408 = vpack.c.bf16 %v406, %v406
    %v409 = vld [vmem:[#allocation9] sm:$0xf]
    %v410 = vld [vmem:[#allocation9 + $0x4] sm:$0xf]
    %v411 = vld [vmem:[#allocation9 + $0x8] sm:$0xf]
    %v412 = vld [vmem:[#allocation9 + $0xc] sm:$0xf]
    %v413 = vld [vmem:[#allocation9 + $0x10] sm:$0xf]
    %v414 = vld [vmem:[#allocation9 + $0x14] sm:$0xf]
    %v415 = vld [vmem:[#allocation9 + $0x18] sm:$0xf]
    %v416 = vld [vmem:[#allocation9 + $0x1c] sm:$0xf]
    %v417 = vld [vmem:[#allocation9 + $0x20] sm:$0xf]
    %v418 = vld [vmem:[#allocation9 + $0x24] sm:$0xf]
    %v419 = vld [vmem:[#allocation9 + $0x28] sm:$0xf]
    %v420 = vld [vmem:[#allocation9 + $0x2c] sm:$0xf]
    %v421 = vld [vmem:[#allocation9 + $0x30] sm:$0xf]
    %v422 = vld [vmem:[#allocation9 + $0x34] sm:$0xf]
    %v423 = vld [vmem:[#allocation9 + $0x38] sm:$0xf]
    %v424 = vld [vmem:[#allocation9 + $0x3c] sm:$0xf]
    %v425 = vld [vmem:[#allocation9 + $0x40] sm:$0xf]
    %v426 = vld [vmem:[#allocation9 + $0x44] sm:$0xf]
    %v427 = vld [vmem:[#allocation9 + $0x48] sm:$0xf]
    %v428 = vld [vmem:[#allocation9 + $0x4c] sm:$0xf]
    %v429 = vld [vmem:[#allocation9 + $0x50] sm:$0xf]
    %v430 = vld [vmem:[#allocation9 + $0x54] sm:$0xf]
    %v431 = vld [vmem:[#allocation9 + $0x58] sm:$0xf]
    %v432 = vld [vmem:[#allocation9 + $0x5c] sm:$0xf]
    %v433 = vld [vmem:[#allocation9 + $0x60] sm:$0xf]
    %v434 = vld [vmem:[#allocation9 + $0x64] sm:$0xf]
    %v435 = vld [vmem:[#allocation9 + $0x68] sm:$0xf]
    %v436 = vld [vmem:[#allocation9 + $0x6c] sm:$0xf]
    %v437 = vld [vmem:[#allocation9 + $0x70] sm:$0xf]
    %v438 = vld [vmem:[#allocation9 + $0x74] sm:$0xf]
    %v439 = vld [vmem:[#allocation9 + $0x78] sm:$0xf]
    %v440 = vld [vmem:[#allocation9 + $0x7c] sm:$0xf]
    %v441 = vld [vmem:[%s6] sm:$0x1]
    %v443 = vperm.slane %v441, 0
    %v477 = vunpack.c.l.b16 %v409
    %v478 = vunpack.c.l.b16 %v410
    %v479 = vunpack.c.l.b16 %v411
    %v480 = vunpack.c.l.b16 %v412
    %v481 = vunpack.c.l.b16 %v413
    %v482 = vunpack.c.l.b16 %v414
    %v483 = vunpack.c.l.b16 %v415
    %v484 = vunpack.c.l.b16 %v416
    %v485 = vunpack.c.l.b16 %v417
    %v486 = vunpack.c.l.b16 %v418
    %v487 = vunpack.c.l.b16 %v419
    %v488 = vunpack.c.l.b16 %v420
    %v489 = vunpack.c.l.b16 %v421
    %v490 = vunpack.c.l.b16 %v422
    %v491 = vunpack.c.l.b16 %v423
    %v492 = vunpack.c.l.b16 %v424
    %v493 = vunpack.c.l.b16 %v425
    %v494 = vunpack.c.l.b16 %v426
    %v495 = vunpack.c.l.b16 %v427
    %v496 = vunpack.c.l.b16 %v428
    %v497 = vunpack.c.l.b16 %v429
    %v498 = vunpack.c.l.b16 %v430
    %v499 = vunpack.c.l.b16 %v431
    %v500 = vunpack.c.l.b16 %v432
    %v501 = vunpack.c.l.b16 %v433
    %v502 = vunpack.c.l.b16 %v434
    %v503 = vunpack.c.l.b16 %v435
    %v504 = vunpack.c.l.b16 %v436
    %v505 = vunpack.c.l.b16 %v437
    %v506 = vunpack.c.l.b16 %v438
    %v507 = vunpack.c.l.b16 %v439
    %v508 = vunpack.c.l.b16 %v440
    %v509 = vpack.c.b16 %v478, %v477
    %v510 = vpack.c.b16 %v480, %v479
    %v511 = vpack.c.b16 %v482, %v481
    %v512 = vpack.c.b16 %v484, %v483
    %v513 = vpack.c.b16 %v486, %v485
    %v514 = vpack.c.b16 %v488, %v487
    %v515 = vpack.c.b16 %v490, %v489
    %v516 = vpack.c.b16 %v492, %v491
    %v517 = vpack.c.b16 %v494, %v493
    %v518 = vpack.c.b16 %v496, %v495
    %v519 = vpack.c.b16 %v498, %v497
    %v520 = vpack.c.b16 %v500, %v499
    %v521 = vpack.c.b16 %v502, %v501
    %v522 = vpack.c.b16 %v504, %v503
    %v523 = vpack.c.b16 %v506, %v505
    %v524 = vpack.c.b16 %v508, %v507
    %541 = vmatpush.bf16.msra.mxu0 %v516
    %542 = vmatpush.bf16.msra.mxu0 %v515
    %543 = vmatpush.bf16.msra.mxu0 %v514
    %544 = vmatpush.bf16.msra.mxu0 %v513
    %545 = vmatpush.bf16.msra.mxu0 %v512
    %546 = vmatpush.bf16.msra.mxu0 %v511
    %547 = vmatpush.bf16.msra.mxu0 %v510
    %548 = vmatpush.bf16.msra.mxu0 %v509
    %549 = vmatmul.bf16.gmra.mxu0 %v407
    %v550 = vpop.f32.mrf.mxu0
    %v551 = vadd.f32 %v443, %v550
    %v552 = vpop.f32.mrf.mxu0
    %553 = vdwg.mxu0
    %554 = vmatpush.bf16.msra.mxu0 %v524
    %555 = vmatpush.bf16.msra.mxu0 %v523
    %556 = vmatpush.bf16.msra.mxu0 %v522
    %557 = vmatpush.bf16.msra.mxu0 %v521
    %558 = vmatpush.bf16.msra.mxu0 %v520
    %559 = vmatpush.bf16.msra.mxu0 %v519
    %560 = vmatpush.bf16.msra.mxu0 %v518
    %561 = vmatpush.bf16.msra.mxu0 %v517
    %562 = vmatmul.bf16.gmra.mxu0 %v408
    %v563 = vpop.f32.mrf.mxu0
    %v564 = vadd.f32 %v551, %v563
    %v565 = vpop.f32.mrf.mxu0
    %566 = vdwg.mxu0
    %567 = vst [vmem:[%s7] sm:$0xff] %v564
    // Predicated region
    $region50: #{_forward.1} parent=1 // pred_check
      _
    $region51: #{_forward.1} parent=1 // pred_check_branch
      %569 = sbr.rel (0) target = $region53
    $region52: #{_forward.1} parent=1 // pred_region
      _
    $region53: #{_forward.1} parent=1 // pred_fallthru
      _
    // Predicated region
    $region54: #{_forward.1} parent=1 // pred_check
      _
    $region55: #{_forward.1} parent=1 // pred_check_branch
      %571 = sbr.rel (0) target = $region57
    $region56: #{_forward.1} parent=1 // pred_region
      _
    $region57: #{_forward.1} parent=1 // pred_fallthru
      _
    %572 = vsyncpa [#allocation3], 1
    %573 = vsyncpa [#allocation5], 1
    %574 = vsyncpa [#allocation8], 1

</llo_original>
